<compile_context>
chip_gen: v7x
topology: tpu7x:2x2x1
jax: 0.10.0
libtpu: 0.0.40
codegen_flags: <defaults>
</compile_context>

<pallas_src>
import jax
import jax.numpy as jnp
from jax.experimental import pallas as pl
from jax.experimental.pallas import tpu as pltpu


# ----------------------------------------------------------------------------
# Helpers
# ----------------------------------------------------------------------------
def _round_up(x, m):
    return ((x + m - 1) // m) * m


def _largest_aligned_divisor(total, cap):
    """Largest multiple of 128 that divides `total` and is <= cap (floor 128)."""
    d = max(128, min(int(cap), int(total)))
    d -= d % 128
    d = max(d, 128)
    while d > 128 and total % d != 0:
        d -= 128
    return d


def _vmem_capacity_bytes():
    """Per-core VMEM capacity; conservative 64 MiB fallback (v7x) if query fails."""
    try:
        return int(pltpu.get_tpu_info().vmem_capacity_bytes)
    except Exception:
        return 64 * 1024 * 1024


# ----------------------------------------------------------------------------
# Kernels
# ----------------------------------------------------------------------------
def _expert_kernel_direct(x_ref, w1_ref, b1_ref, w2_ref, b2_ref, o_ref):
    """f32-output path: accumulate straight into the resident output block."""
    hk = pl.program_id(1)

    @pl.when(hk == 0)
    def _init():
        # Seed the accumulator with b2 (broadcast once per batch tile).
        o_ref[...] = jnp.broadcast_to(b2_ref[...], o_ref.shape)

    # Linear1 over this hidden tile (bf16 in, f32 MXU accumulation) + bias + ReLU.
    h = jnp.dot(x_ref[...], w1_ref[...], preferred_element_type=jnp.float32)
    h = jnp.maximum(h + b1_ref[pl.ds(hk, 1), :], 0.0)

    # Linear2: accumulate this hidden tile's contribution in f32.
    o_ref[...] += jnp.dot(h.astype(w2_ref.dtype), w2_ref[...],
                          preferred_element_type=jnp.float32)
    # TODO(synk): training-mode nn.Dropout(p) (pltpu.prng_seed/prng_random_bits
    # mask + 1/(1-p) scale) not implemented; eval-mode identity semantics used.


def _expert_kernel_scratch(x_ref, w1_ref, b1_ref, w2_ref, b2_ref, o_ref, acc_ref):
    """Non-f32-output path: f32 VMEM accumulator, cast on the last hidden step."""
    hk = pl.program_id(1)

    @pl.when(hk == 0)
    def _init():
        acc_ref[...] = jnp.broadcast_to(b2_ref[...], acc_ref.shape)

    h = jnp.dot(x_ref[...], w1_ref[...], preferred_element_type=jnp.float32)
    h = jnp.maximum(h + b1_ref[pl.ds(hk, 1), :], 0.0)
    acc_ref[...] += jnp.dot(h.astype(w2_ref.dtype), w2_ref[...],
                            preferred_element_type=jnp.float32)

    @pl.when(hk == pl.num_programs(1) - 1)
    def _finalize():
        o_ref[...] = acc_ref[...].astype(o_ref.dtype)


# ----------------------------------------------------------------------------
# Wrapper
# ----------------------------------------------------------------------------
def expert_forward(x, w1, b1, w2, b2, *, tm=512, th=512,
                   matmul_dtype=jnp.bfloat16, weight_buffers=2):
    """x: [B, input_dim] -> [B, output_dim].

    w1: [input_dim, hidden_dim], b1: [1, hidden_dim]
    w2: [hidden_dim, output_dim], b2: [1, output_dim]
    weight_buffers: pipeline depth for W1/W2 tiles (set 3 on v5e to hide the
    weight DMA behind compute; default 2 = standard double buffering).
    """
    B, input_dim = x.shape
    hidden_dim = w1.shape[1]
    output_dim = w2.shape[1]
    out_dtype = x.dtype

    assert w1.shape == (input_dim, hidden_dim)
    assert w2.shape == (hidden_dim, output_dim)
    assert b1.shape == (1, hidden_dim) and b2.shape == (1, output_dim)
    assert input_dim % 128 == 0 and hidden_dim % 128 == 0 and output_dim % 128 == 0, (
        "feature dims must be 128-aligned for lane-dense tiles")

    direct_acc = (out_dtype == jnp.float32)
    bpe = jnp.dtype(matmul_dtype).itemsize
    out_bpe = jnp.dtype(out_dtype).itemsize

    # --- batch tile: multiple of 16 (bf16 sublanes), >= 2 tiles when batch allows
    # (keeps both v7x TensorCores busy). Batch is padded to a tile multiple.
    B16 = _round_up(B, 16)
    tm = int(min(tm, B16))
    tm = max(16, tm - tm % 16)
    if B16 >= 32:
        half = B16 // 2
        tm = min(tm, max(16, half - half % 16))

    # --- hidden tile: multiple of 128 dividing hidden_dim -----------------------
    th = _largest_aligned_divisor(hidden_dim, th)

    # --- shrink tiles until the working set fits the per-core VMEM budget -------
    vmem_cap = _vmem_capacity_bytes()
    vmem_budget = int(0.85 * vmem_cap)   # leave headroom for compiler scratch

    def working_set(tm_, th_):
        b1_rows = _round_up(hidden_dim // th_, 8)
        return (2 * tm_ * input_dim * bpe                       # x tile (dbl-buf)
                + weight_buffers * input_dim * th_ * bpe        # W1 tile
                + weight_buffers * th_ * output_dim * bpe       # W2 tile
                + 2 * b1_rows * th_ * 4                         # resident b1 (f32)
                + 2 * 8 * output_dim * 4                        # resident b2 (f32)
                + 2 * tm_ * output_dim * out_bpe                # output tile
                + (0 if direct_acc else tm_ * output_dim * 4))  # f32 scratch acc

    while working_set(tm, th) > vmem_budget:
        if th > 128:
            th = _largest_aligned_divisor(hidden_dim, th - 128)
        elif tm > 16:
            tm = max(16, ((tm // 2) // 16) * 16)
        else:
            raise ValueError(
                f"Expert tiles do not fit the VMEM budget ({vmem_budget} B): "
                f"minimum working set is {working_set(tm, th)} B")

    B_pad = _round_up(B, tm)
    n_th = hidden_dim // th
    grid = (B_pad // tm, n_th)

    # --- operands: bf16 MXU inputs, f32 biases ----------------------------------
    x_c = x.astype(matmul_dtype)
    if B_pad != B:
        x_c = jnp.pad(x_c, ((0, B_pad - B), (0, 0)))
    w1_c = w1.astype(matmul_dtype)
    w2_c = w2.astype(matmul_dtype)
    b1_c = b1.astype(jnp.float32).reshape(n_th, th)   # resident; sliced per hk
    b2_c = b2.astype(jnp.float32)

    def _weight_spec(shape, index_map):
        if weight_buffers == 2:
            return pl.BlockSpec(shape, index_map)
        return pl.BlockSpec(shape, index_map,
                            pipeline_mode=pl.Buffered(weight_buffers))

    in_specs = [
        pl.BlockSpec((tm, input_dim), lambda i, hk: (i, 0)),      # x tile
        _weight_spec((input_dim, th), lambda i, hk: (0, hk)),     # W1 tile
        pl.BlockSpec((n_th, th), lambda i, hk: (0, 0)),           # b1 (resident)
        _weight_spec((th, output_dim), lambda i, hk: (hk, 0)),    # W2 tile
        pl.BlockSpec((1, output_dim), lambda i, hk: (0, 0)),      # b2 (resident)
    ]
    out_specs = pl.BlockSpec((tm, output_dim), lambda i, hk: (i, 0))
    scratch_shapes = [] if direct_acc else [pltpu.VMEM((tm, output_dim), jnp.float32)]
    kernel = _expert_kernel_direct if direct_acc else _expert_kernel_scratch

    # --- compiler hints ----------------------------------------------------------
    vmem_limit = int(min(0.9 * vmem_cap,
                         max(32 * 1024 * 1024, 2 * working_set(tm, th))))
    flops = 2 * B_pad * (input_dim * hidden_dim + hidden_dim * output_dim)
    bytes_accessed = (
        B_pad * input_dim * bpe                                                       # x read
        + (B_pad // tm) * (input_dim * hidden_dim + hidden_dim * output_dim) * bpe    # weight restreams
        + (hidden_dim + output_dim) * 4                                               # biases
        + B_pad * output_dim * out_bpe)                                               # output writeback

    out = pl.pallas_call(
        kernel,
        out_shape=jax.ShapeDtypeStruct((B_pad, output_dim), out_dtype),
        grid_spec=pltpu.PrefetchScalarGridSpec(
            num_scalar_prefetch=0,
            grid=grid,
            in_specs=in_specs,
            out_specs=out_specs,
            scratch_shapes=scratch_shapes,
        ),
        compiler_params=pltpu.CompilerParams(
            dimension_semantics=("parallel", "arbitrary"),
            vmem_limit_bytes=vmem_limit,
        ),
        cost_estimate=pl.CostEstimate(
            flops=flops, transcendentals=0, bytes_accessed=bytes_accessed),
    )(x_c, w1_c, b1_c, w2_c, b2_c)

    return out[:B] if B_pad != B else out


# ----------------------------------------------------------------------------
# Self-test
# ----------------------------------------------------------------------------
if __name__ == "__main__":
    # Small but lane-aligned shapes: 2 batch tiles (feeds both v7x TCs) and
    # (for the forced-small-tile run) 2 hidden tiles exercising accumulation.
    batch, input_dim, hidden_dim, output_dim = 256, 128, 256, 128

    key = jax.random.PRNGKey(0)
    kx, kw1, kb1, kw2, kb2 = jax.random.split(key, 5)

    x = jax.random.normal(kx, (batch, input_dim), dtype=jnp.float32)
    # Deterministic parameter init (scaled normal; nn.Linear weights, transposed).
    w1 = jax.random.normal(kw1, (input_dim, hidden_dim), dtype=jnp.float32) * 0.1
    b1 = jax.random.normal(kb1, (1, hidden_dim), dtype=jnp.float32) * 0.1
    w2 = jax.random.normal(kw2, (hidden_dim, output_dim), dtype=jnp.float32) * 0.1
    b2 = jax.random.normal(kb2, (1, output_dim), dtype=jnp.float32) * 0.1

    # Pure-JAX reference with the same precision choice (bf16 MXU inputs,
    # f32 accumulation), eval-mode dropout (identity).
    xb, w1b, w2b = (x.astype(jnp.bfloat16), w1.astype(jnp.bfloat16),
                    w2.astype(jnp.bfloat16))
    h_ref = jnp.maximum(
        jnp.dot(xb, w1b, preferred_element_type=jnp.float32) + b1, 0.0)
    ref = jnp.dot(h_ref.astype(jnp.bfloat16), w2b,
                  preferred_element_type=jnp.float32) + b2

    # 1) Auto-selected tiles (VMEM-budget / generation-aware defaults).
    out_auto = jax.block_until_ready(expert_forward(x, w1, b1, w2, b2))
    # 2) Forced small tiles: exercises the multi-step hidden accumulation path.
    out_small = jax.block_until_ready(
        expert_forward(x, w1, b1, w2, b2, tm=128, th=128))

    for out in (out_auto, out_small):
        assert out.shape == (batch, output_dim)
        assert out.dtype == x.dtype
        assert jnp.allclose(out, ref.astype(x.dtype), atol=2e-2, rtol=2e-2), (
            float(jnp.max(jnp.abs(out - ref))))

    # 3) bf16 input/output: exercises the f32-scratch accumulator path.
    out_bf16 = jax.block_until_ready(
        expert_forward(x.astype(jnp.bfloat16), w1, b1, w2, b2))
    assert out_bf16.shape == (batch, output_dim)
    assert out_bf16.dtype == jnp.bfloat16
    assert jnp.allclose(out_bf16.astype(jnp.float32), ref, atol=1e-1, rtol=1e-1), (
        float(jnp.max(jnp.abs(out_bf16.astype(jnp.float32) - ref))))

    print("KERNEL_OK")
</pallas_src>

<mosaic_0001>
module attributes {stable_mosaic.version = 11 : i64} {
  func.func @_expert_kernel_direct(%arg0: i32, %arg1: i32, %arg2: memref<128x128xbf16, #tpu.memory_space<vmem>>, %arg3: memref<128x256xbf16, #tpu.memory_space<vmem>>, %arg4: memref<1x256xf32, #tpu.memory_space<vmem>>, %arg5: memref<256x128xbf16, #tpu.memory_space<vmem>>, %arg6: memref<1x128xf32, #tpu.memory_space<vmem>>, %arg7: memref<128x128xf32, #tpu.memory_space<vmem>>) attributes {dimension_semantics = [#tpu.dimension_semantics<parallel>, #tpu.dimension_semantics<arbitrary>], iteration_bounds = array<i64: 2, 1>, scalar_prefetch = 0 : i64, scratch_operands = 0 : i64, tpu.core_type = #tpu.core_type<tc>, window_params = [{transform_indices = @transform_0, window_bounds = array<i64: 128, 128>}, {transform_indices = @transform_1, window_bounds = array<i64: 128, 256>}, {pipeline_mode = #tpu.pipeline_mode<synchronous>, transform_indices = @transform_2, window_bounds = array<i64: 1, 256>}, {transform_indices = @transform_3, window_bounds = array<i64: 256, 128>}, {pipeline_mode = #tpu.pipeline_mode<synchronous>, transform_indices = @transform_4, window_bounds = array<i64: 1, 128>}, {transform_indices = @transform_5, window_bounds = array<i64: 128, 128>}]} {
    %c0_i32 = arith.constant 0 : i32
    %0 = arith.cmpi eq, %arg1, %c0_i32 : i32
    %1 = arith.extui %0 : i1 to i32
    %c0_i32_0 = arith.constant 0 : i32
    %2 = arith.cmpi ne, %1, %c0_i32_0 : i32
    scf.if %2 {
      %c0_13 = arith.constant 0 : index
      %c0_14 = arith.constant 0 : index
      %18 = vector.load %arg6[%c0_13, %c0_14] : memref<1x128xf32, #tpu.memory_space<vmem>>, vector<1x128xf32>
      %19 = vector.shape_cast %18 : vector<1x128xf32> to vector<1x128xf32>
      %20 = vector.broadcast %19 : vector<1x128xf32> to vector<128x128xf32>
      %c0_15 = arith.constant 0 : index
      %c0_16 = arith.constant 0 : index
      %21 = vector.load %arg7[%c0_15, %c0_16] : memref<128x128xf32, #tpu.memory_space<vmem>>, vector<128x128xf32>
      tpu.vector_store %arg7[%c0_15, %c0_16], %20 {strides = array<i32>} : memref<128x128xf32, #tpu.memory_space<vmem>>, vector<128x128xf32>,
    } else {
    }
    %c0 = arith.constant 0 : index
    %c0_1 = arith.constant 0 : index
    %3 = vector.load %arg2[%c0, %c0_1] : memref<128x128xbf16, #tpu.memory_space<vmem>>, vector<128x128xbf16>
    %c0_2 = arith.constant 0 : index
    %c0_3 = arith.constant 0 : index
    %4 = vector.load %arg3[%c0_2, %c0_3] : memref<128x256xbf16, #tpu.memory_space<vmem>>, vector<128x256xbf16>
    %cst = arith.constant dense<0.000000e+00> : vector<128x256xf32>
    %5 = tpu.matmul %3, %4, %cst {dimension_numbers = #tpu.dot_dimension_numbers<[1], [0], [0], [1], [0, 0, 1, 1], [], []>} : vector<128x128xbf16>, vector<128x256xbf16>, vector<128x256xf32> -> vector<128x256xf32>
    %6 = arith.index_cast %arg1 : i32 to index
    %c0_4 = arith.constant 0 : index
    %7 = vector.load %arg4[%6, %c0_4] : memref<1x256xf32, #tpu.memory_space<vmem>>, vector<1x256xf32>
    %8 = vector.broadcast %7 : vector<1x256xf32> to vector<128x256xf32>
    %9 = arith.addf %5, %8 : vector<128x256xf32>
    %cst_5 = arith.constant 0.000000e+00 : f32
    %10 = vector.broadcast %cst_5 : f32 to vector<128x256xf32>
    %11 = arith.maximumf %9, %10 : vector<128x256xf32>
    %c0_6 = arith.constant 0 : index
    %c0_7 = arith.constant 0 : index
    %12 = vector.load %arg7[%c0_6, %c0_7] : memref<128x128xf32, #tpu.memory_space<vmem>>, vector<128x128xf32>
    %13 = arith.truncf %11 : vector<128x256xf32> to vector<128x256xbf16>
    %c0_8 = arith.constant 0 : index
    %c0_9 = arith.constant 0 : index
    %14 = vector.load %arg5[%c0_8, %c0_9] : memref<256x128xbf16, #tpu.memory_space<vmem>>, vector<256x128xbf16>
    %cst_10 = arith.constant dense<0.000000e+00> : vector<128x128xf32>
    %15 = tpu.matmul %13, %14, %cst_10 {dimension_numbers = #tpu.dot_dimension_numbers<[1], [0], [0], [1], [0, 0, 1, 1], [], []>} : vector<128x256xbf16>, vector<256x128xbf16>, vector<128x128xf32> -> vector<128x128xf32>
    %16 = arith.addf %12, %15 : vector<128x128xf32>
    %c0_11 = arith.constant 0 : index
    %c0_12 = arith.constant 0 : index
    %17 = vector.load %arg7[%c0_11, %c0_12] : memref<128x128xf32, #tpu.memory_space<vmem>>, vector<128x128xf32>
    tpu.vector_store %arg7[%c0_11, %c0_12], %16 {strides = array<i32>} : memref<128x128xf32, #tpu.memory_space<vmem>>, vector<128x128xf32>,
    return
  }
  func.func @transform_0(%arg0: i32, %arg1: i32) -> (i32, i32) {
    %c0_i32 = arith.constant 0 : i32
    %c0_i32_0 = arith.constant 0 : i32
    return %arg0, %c0_i32 : i32, i32
  }
  func.func @transform_1(%arg0: i32, %arg1: i32) -> (i32, i32) {
    %c0_i32 = arith.constant 0 : i32
    %c0_i32_0 = arith.constant 0 : i32
    return %c0_i32, %arg1 : i32, i32
  }
  func.func @transform_2(%arg0: i32, %arg1: i32) -> (i32, i32) {
    %c0_i32 = arith.constant 0 : i32
    %c0_i32_0 = arith.constant 0 : i32
    %c0_i32_1 = arith.constant 0 : i32
    return %c0_i32, %c0_i32_0 : i32, i32
  }
  func.func @transform_3(%arg0: i32, %arg1: i32) -> (i32, i32) {
    %c0_i32 = arith.constant 0 : i32
    %c0_i32_0 = arith.constant 0 : i32
    return %arg1, %c0_i32 : i32, i32
  }
  func.func @transform_4(%arg0: i32, %arg1: i32) -> (i32, i32) {
    %c0_i32 = arith.constant 0 : i32
    %c0_i32_0 = arith.constant 0 : i32
    %c0_i32_1 = arith.constant 0 : i32
    return %c0_i32, %c0_i32_0 : i32, i32
  }
  func.func @transform_5(%arg0: i32, %arg1: i32) -> (i32, i32) {
    %c0_i32 = arith.constant 0 : i32
    %c0_i32_0 = arith.constant 0 : i32
    return %arg0, %c0_i32 : i32, i32
  }
}

</mosaic_0001>

<llo_original>
// kernel: tpu_custom_call.1
$region0: #{tpu_custom_call.1}
  #allocation0 [shape = 'u32[]', space=smem, size = 0x4, offset = 0x4, fixed_abs, tag = 'smem constant byte address 0x4 - core index']
  #allocation1 [shape = 'u32[144,128]{1,0:T(1,128)}', space=vmem, size = 0x12000, scoped, tag = 'internal scratch']
  %s0 = inlined_call_operand.hbm [shape: bf16[256,128], index: 0, kind: input, shape index: {}]
  %s1 = inlined_call_operand.hbm [shape: bf16[128,256], index: 1, kind: input, shape index: {}]
  %s2 = inlined_call_operand.vmem [shape: f32[1,256], index: 2, kind: input, shape index: {}]
  %s3 = inlined_call_operand.hbm [shape: bf16[256,128], index: 3, kind: input, shape index: {}]
  %s4 = inlined_call_operand.vmem [shape: f32[1,128], index: 4, kind: input, shape index: {}]
  %s5 = inlined_call_operand.hbm [shape: f32[256,128], index: 5, kind: output, shape index: {}]
  %s6 = sld [smem:[#allocation0]]
  $region69: #{tpu_custom_call.1} parent=0
    _
  %s8 = ssub.s32 1, %s6
  %s9 = scalar_select 0, %s8, %s6
  $region1: #{tpu_custom_call.1} parent=0
    #allocation2 [shape = 'u8[65536]{0}', space=vmem, size = 0x10000, scoped, tag = 'input window, operand 0']
    #allocation3 [shape = 's32[2]{0}', space=sflag, size = 0x8, scoped, tag = 'scoped memory for tpu_custom_call.1']
    #allocation4 [shape = 's32[2]{0}', space=sflag, size = 0x8, scoped, tag = 'scoped memory for tpu_custom_call.1']
    #allocation5 [shape = 'u8[65536]{0}', space=vmem, size = 0x10000, scoped, tag = 'input window, operand 1, single buffered']
    #allocation6 [shape = 's32[1]{0}', space=sflag, size = 0x4, scoped, tag = 'scoped memory for tpu_custom_call.1']
    #allocation7 [shape = 'u8[65536]{0}', space=vmem, size = 0x10000, scoped, tag = 'input window, operand 3, single buffered']
    #allocation8 [shape = 'u8[131072]{0}', space=vmem, size = 0x20000, scoped, tag = 'output window, operand 0']
    %10 = vsyncpa [#allocation3], 0
    %s11 = scalar_lea.sflag [#allocation3], 1
    %12 = vsyncpa %s11, 0
    %13 = vsyncpa [#allocation6], 0
    %14 = vsyncpa [#allocation4], 0
    %s15 = scalar_lea.sflag [#allocation4], 1
    %16 = vsyncpa %s15, 0
    loop: start=0, step=1, limit=4
    $region2: #{tpu_custom_call.1} parent=1 // loop_pre_header
      _
    $region3: #{tpu_custom_call.1} parent=1 // loop_header
      %s18 = sphi 0, %s22
      %p19 = scmp.ge.s32.totalorder %s18, 4
      %s25 = sphi 0, %s37
      %s26 = sphi 0, %s33
      %s27 = sphi 0, %s25
      %s28 = sphi 0, %s26
      %s29 = sphi 0, %s27
      %s30 = sphi 0, %s28
      %s40 = sphi 0, %s42
      %s43 = sphi 0, %s40
      %s44 = sphi 0, %s43
      %s60 = sphi 0, %s44
      %s66 = sphi 0, %s68
      %s69 = sphi 0, %s66
      %s70 = sphi 0, %s69
      %s86 = sphi 0, %s70
      %s90 = sphi 0, %s90
      %s92 = sphi 0, %s90
      %s93 = sphi 0, %s92
      %s107 = sphi 0, %s93
      %s113 = sphi 0, %s115
      %s116 = sphi 0, %s113
      %s117 = sphi 0, %s116
      %s133 = sphi 0, %s117
      %s137 = sphi 0, %s137
      %s139 = sphi 0, %s137
      %s140 = sphi 0, %s139
      %s154 = sphi 0, %s140
      %s160 = sphi 0, %s162
      %s163 = sphi 0, %s160
      %s164 = sphi 0, %s163
      %s180 = sphi 0, %s164
    $region4: #{tpu_custom_call.1} parent=1 // loop_header_branch
      %21 = sbr.rel (%p19) target = $region8
    $region5: #{tpu_custom_call.1} parent=1 // loop_body
      %s23 = ssub.s32 %s18, 1
      %s24 = ssub.s32 %s18, 2
      %s31 = sadd.s32 1, %s26
      %p32 = scmp.ge.s32.totalorder %s31, 1
      %s33 = scalar_select %p32, 0, %s31
      %s34 = sadd.s32 1, %s25
      %s35 = scalar_select %p32, %s34, %s25
      %p36 = scmp.ge.s32.totalorder %s35, 2
      %s37 = scalar_select %p36, 0, %s35
      %s38 = ssub.s32 %s25, %s37
      %p39 = scmp.eq.s32.totalorder %s38, 0
      %s41 = sadd.s32 %s40, 1
      %s42 = scalar_select %p39, %s40, %s41
      %p45 = pneg %p39
      %p46 = scmp.eq.s32.totalorder %s18, 1
      %p47 = por %p45, %p46
      %p48 = scmp.ne.s32.totalorder %s40, %s43
      %p49 = scmp.eq.s32.totalorder %s18, 0
      %p50 = por %p48, %p49
      %p51 = scmp.ne.s32.totalorder %s40, %s43
      %p52 = scmp.eq.s32.totalorder %s23, 1
      %p53 = por %p51, %p52
      %p54 = scmp.ne.s32.totalorder %s43, %s44
      %p55 = scmp.eq.s32.totalorder %s23, 0
      %p56 = por %p54, %p55
      %p57 = scmp.ne.s32.totalorder %s43, %s44
      %p58 = scmp.eq.s32.totalorder %s24, 1
      %p59 = por %p57, %p58
      %p61 = scmp.ne.s32.totalorder %s44, %s60
      %p62 = scmp.eq.s32.totalorder %s24, 0
      %p63 = por %p61, %p62
      %s64 = ssub.s32 %s26, %s33
      %p65 = scmp.eq.s32.totalorder %s64, 0
      %s67 = sadd.s32 %s66, 1
      %s68 = scalar_select %p65, %s66, %s67
      %p71 = pneg %p65
      %p72 = scmp.eq.s32.totalorder %s18, 1
      %p73 = por %p71, %p72
      %p74 = scmp.ne.s32.totalorder %s66, %s69
      %p75 = scmp.eq.s32.totalorder %s18, 0
      %p76 = por %p74, %p75
      %p77 = scmp.ne.s32.totalorder %s66, %s69
      %p78 = scmp.eq.s32.totalorder %s23, 1
      %p79 = por %p77, %p78
      %p80 = scmp.ne.s32.totalorder %s69, %s70
      %p81 = scmp.eq.s32.totalorder %s23, 0
      %p82 = por %p80, %p81
      %p83 = scmp.ne.s32.totalorder %s69, %s70
      %p84 = scmp.eq.s32.totalorder %s24, 1
      %p85 = por %p83, %p84
      %p87 = scmp.ne.s32.totalorder %s70, %s86
      %p88 = scmp.eq.s32.totalorder %s24, 0
      %p89 = por %p87, %p88
      %s91 = sadd.s32 %s90, 1
      %p94 = scmp.eq.s32.totalorder %s18, 1
      %p95 = scmp.ne.s32.totalorder %s90, %s92
      %p96 = scmp.eq.s32.totalorder %s18, 0
      %p97 = por %p95, %p96
      %p98 = scmp.ne.s32.totalorder %s90, %s92
      %p99 = scmp.eq.s32.totalorder %s23, 1
      %p100 = por %p98, %p99
      %p101 = scmp.ne.s32.totalorder %s92, %s93
      %p102 = scmp.eq.s32.totalorder %s23, 0
      %p103 = por %p101, %p102
      %p104 = scmp.ne.s32.totalorder %s92, %s93
      %p105 = scmp.eq.s32.totalorder %s24, 1
      %p106 = por %p104, %p105
      %p108 = scmp.ne.s32.totalorder %s93, %s107
      %p109 = scmp.eq.s32.totalorder %s24, 0
      %p110 = por %p108, %p109
      %s111 = ssub.s32 %s26, %s33
      %p112 = scmp.eq.s32.totalorder %s111, 0
      %s114 = sadd.s32 %s113, 1
      %s115 = scalar_select %p112, %s113, %s114
      %p118 = pneg %p112
      %p119 = scmp.eq.s32.totalorder %s18, 1
      %p120 = por %p118, %p119
      %p121 = scmp.ne.s32.totalorder %s113, %s116
      %p122 = scmp.eq.s32.totalorder %s18, 0
      %p123 = por %p121, %p122
      %p124 = scmp.ne.s32.totalorder %s113, %s116
      %p125 = scmp.eq.s32.totalorder %s23, 1
      %p126 = por %p124, %p125
      %p127 = scmp.ne.s32.totalorder %s116, %s117
      %p128 = scmp.eq.s32.totalorder %s23, 0
      %p129 = por %p127, %p128
      %p130 = scmp.ne.s32.totalorder %s116, %s117
      %p131 = scmp.eq.s32.totalorder %s24, 1
      %p132 = por %p130, %p131
      %p134 = scmp.ne.s32.totalorder %s117, %s133
      %p135 = scmp.eq.s32.totalorder %s24, 0
      %p136 = por %p134, %p135
      %s138 = sadd.s32 %s137, 1
      %p141 = scmp.eq.s32.totalorder %s18, 1
      %p142 = scmp.ne.s32.totalorder %s137, %s139
      %p143 = scmp.eq.s32.totalorder %s18, 0
      %p144 = por %p142, %p143
      %p145 = scmp.ne.s32.totalorder %s137, %s139
      %p146 = scmp.eq.s32.totalorder %s23, 1
      %p147 = por %p145, %p146
      %p148 = scmp.ne.s32.totalorder %s139, %s140
      %p149 = scmp.eq.s32.totalorder %s23, 0
      %p150 = por %p148, %p149
      %p151 = scmp.ne.s32.totalorder %s139, %s140
      %p152 = scmp.eq.s32.totalorder %s24, 1
      %p153 = por %p151, %p152
      %p155 = scmp.ne.s32.totalorder %s140, %s154
      %p156 = scmp.eq.s32.totalorder %s24, 0
      %p157 = por %p155, %p156
      %s158 = ssub.s32 %s25, %s37
      %p159 = scmp.eq.s32.totalorder %s158, 0
      %s161 = sadd.s32 %s160, 1
      %s162 = scalar_select %p159, %s160, %s161
      %p165 = pneg %p159
      %p166 = scmp.eq.s32.totalorder %s18, 1
      %p167 = por %p165, %p166
      %p168 = scmp.ne.s32.totalorder %s160, %s163
      %p169 = scmp.eq.s32.totalorder %s18, 0
      %p170 = por %p168, %p169
      %p171 = scmp.ne.s32.totalorder %s160, %s163
      %p172 = scmp.eq.s32.totalorder %s23, 1
      %p173 = por %p171, %p172
      %p174 = scmp.ne.s32.totalorder %s163, %s164
      %p175 = scmp.eq.s32.totalorder %s23, 0
      %p176 = por %p174, %p175
      %p177 = scmp.ne.s32.totalorder %s163, %s164
      %p178 = scmp.eq.s32.totalorder %s24, 1
      %p179 = por %p177, %p178
      %p181 = scmp.ne.s32.totalorder %s164, %s180
      %p182 = scmp.eq.s32.totalorder %s24, 0
      %p183 = por %p181, %p182
      %p184 = scmp.le.s32.totalorder 1, %s18
      %p185 = scmp.lt.s32.totalorder %s18, 3
      %p186 = pnand %p184, %p185
      %p187 = pneg %p186
      // Predicated region
      $region9: #{tpu_custom_call.1} parent=5 // pred_check
        _
      $region10: #{tpu_custom_call.1} parent=5 // pred_check_branch
        %189 = sbr.rel (%p186) target = $region12
      $region11: #{tpu_custom_call.1} parent=5 // pred_region
        %s190 = ssub.s32 %s18, 1
        // Predicated region
        $region13: #{tpu_custom_call.1} parent=11 // pred_check
          %p191 = pneg %p82
        $region14: #{tpu_custom_call.1} parent=11 // pred_check_branch
          %193 = sbr.rel (%p191) target = $region16
        $region15: #{tpu_custom_call.1} parent=11 // pred_region
          %s194 = smul.u32 2, %s28
          %s196 = ssub.s32 2048, 2048
          %197 = vsyncadd [#allocation6], %s196
          %s198 = smul.addr %s194, 64
          %s199 = scalar_lea.hbm %s1, %s198
          %s200 = sshll.u32 [#allocation5], 4
          %s201 = int_to_ptr.vmem [resolvable:$true] %s200
          %206 = dma.hbm_to_vmem [thread:$0]  %s199, 2048, %s201, [#allocation6], 128, 128, 8
        $region16: #{tpu_custom_call.1} parent=11 // pred_fallthru
          _
        // Predicated region
        $region17: #{tpu_custom_call.1} parent=11 // pred_check
          %p207 = pneg %p103
        $region18: #{tpu_custom_call.1} parent=11 // pred_check_branch
          %209 = sbr.rel (%p207) target = $region20
        $region19: #{tpu_custom_call.1} parent=11 // pred_region
          _
        $region20: #{tpu_custom_call.1} parent=11 // pred_fallthru
          _
        // Predicated region
        $region21: #{tpu_custom_call.1} parent=11 // pred_check
          %p210 = pneg %p129
        $region22: #{tpu_custom_call.1} parent=11 // pred_check_branch
          %212 = sbr.rel (%p210) target = $region24
        $region23: #{tpu_custom_call.1} parent=11 // pred_region
          %s213 = smul.u32 32, %s28
          %s215 = ssub.s32 2048, 2048
          %216 = vsyncadd [#allocation6], %s215
          %s217 = smul.addr %s213, 64
          %s218 = scalar_lea.hbm %s3, %s217
          %s219 = sshll.u32 [#allocation7], 4
          %s220 = int_to_ptr.vmem [resolvable:$true] %s219
          %225 = dma.hbm_to_vmem [thread:$0]  %s218, 2048, %s220, [#allocation6], 64, 64, 4
        $region24: #{tpu_custom_call.1} parent=11 // pred_fallthru
          _
        // Predicated region
        $region25: #{tpu_custom_call.1} parent=11 // pred_check
          %p226 = pneg %p150
        $region26: #{tpu_custom_call.1} parent=11 // pred_check_branch
          %228 = sbr.rel (%p226) target = $region28
        $region27: #{tpu_custom_call.1} parent=11 // pred_region
          _
        $region28: #{tpu_custom_call.1} parent=11 // pred_fallthru
          _
      $region12: #{tpu_custom_call.1} parent=5 // pred_fallthru
        _
      %p229 = scmp.lt.s32.totalorder %s18, 2
      // Predicated region
      $region29: #{tpu_custom_call.1} parent=5 // pred_check
        %p230 = pneg %p229
      $region30: #{tpu_custom_call.1} parent=5 // pred_check_branch
        %232 = sbr.rel (%p230) target = $region32
      $region31: #{tpu_custom_call.1} parent=5 // pred_region
        // Predicated region
        $region33: #{tpu_custom_call.1} parent=31 // pred_check
          %p233 = pneg %p50
        $region34: #{tpu_custom_call.1} parent=31 // pred_check_branch
          %235 = sbr.rel (%p233) target = $region36
        $region35: #{tpu_custom_call.1} parent=31 // pred_region
          %s236 = sand.u32 %s40, 1
          %s237 = scalar_lea.sflag [#allocation3], %s236
          %s238 = sand.u32 %s40, 1
          %s239 = smul.addr %s238, 64
          %s240 = scalar_lea.vmem [#allocation2], %s239
          %s241 = smul.u32 16, %s25
          %s243 = ssub.s32 1024, 1024
          %244 = vsyncadd %s237, %s243
          %s245 = smul.addr %s241, 64
          %s246 = scalar_lea.hbm %s0, %s245
          %s247 = sshll.u32 %s240, 4
          %s248 = int_to_ptr.vmem [resolvable:$true] %s247
          %253 = dma.hbm_to_vmem [thread:$0]  %s246, 1024, %s248, %s237, 64, 64, 4
        $region36: #{tpu_custom_call.1} parent=31 // pred_fallthru
          _
      $region32: #{tpu_custom_call.1} parent=5 // pred_fallthru
        _
      %p254 = scmp.le.s32.totalorder 1, %s18
      %p255 = scmp.lt.s32.totalorder %s18, 3
      %p256 = pnand %p254, %p255
      %p257 = pneg %p256
      // Predicated region
      $region37: #{tpu_custom_call.1} parent=5 // pred_check
        _
      $region38: #{tpu_custom_call.1} parent=5 // pred_check_branch
        %259 = sbr.rel (%p256) target = $region40
      $region39: #{tpu_custom_call.1} parent=5 // pred_region
        %s260 = ssub.s32 %s18, 1
        %s261 = sand.u32 %s43, 1
        %s262 = scalar_lea.sflag [#allocation3], %s261
        %s263 = sand.u32 %s43, 1
        %s264 = smul.addr %s263, 64
        %s265 = scalar_lea.vmem [#allocation2], %s264
        // Predicated region
        $region41: #{tpu_custom_call.1} parent=39 // pred_check
          %p266 = pneg %p56
        $region42: #{tpu_custom_call.1} parent=39 // pred_check_branch
          %268 = sbr.rel (%p266) target = $region44
        $region43: #{tpu_custom_call.1} parent=39 // pred_region
          %269 = dma.done %s262, 1024
        $region44: #{tpu_custom_call.1} parent=39 // pred_fallthru
          _
        // Predicated region
        $region45: #{tpu_custom_call.1} parent=39 // pred_check
          %p270 = pneg %p82
        $region46: #{tpu_custom_call.1} parent=39 // pred_check_branch
          %272 = sbr.rel (%p270) target = $region48
        $region47: #{tpu_custom_call.1} parent=39 // pred_region
          %273 = dma.done [#allocation6], 2048
        $region48: #{tpu_custom_call.1} parent=39 // pred_fallthru
          _
        // Predicated region
        $region49: #{tpu_custom_call.1} parent=39 // pred_check
          %p274 = pneg %p129
        $region50: #{tpu_custom_call.1} parent=39 // pred_check_branch
          %276 = sbr.rel (%p274) target = $region52
        $region51: #{tpu_custom_call.1} parent=39 // pred_region
          %277 = dma.done [#allocation6], 2048
        $region52: #{tpu_custom_call.1} parent=39 // pred_fallthru
          _
        %s278 = sand.u32 %s43, 1
        %s279 = scalar_lea.sflag [#allocation3], %s278
        %s280 = sand.u32 %s43, 1
        %s281 = smul.addr %s280, 64
        %s282 = scalar_lea.vmem [#allocation2], %s281
        %p283 = pneg %p56
        %p284 = pneg %p53
        %p285 = pneg %p82
        %p286 = pneg %p79
        %p287 = pneg %p103
        %p288 = pneg %p100
        %p289 = pneg %p129
        %p290 = pneg %p126
        %p291 = pneg %p150
        %p292 = pneg %p147
        %p293 = pneg %p176
        %p294 = pneg %p173
        %s295 = sand.u32 %s163, 1
        %s296 = scalar_lea.sflag [#allocation4], %s295
        %s297 = sand.u32 %s163, 1
        %s298 = smul.addr %s297, 128
        %s299 = scalar_lea.vmem [#allocation8], %s298
        %s300 = smul.u32 16, %s27
        %s301 = smul.u32 2, %s28
        %s302 = smul.u32 32, %s28
        %s303 = smul.u32 16, %s27
        %p305 = scmp.eq.s32.totalorder %s28, 0
        // Predicated region
        $region53: #{tpu_custom_call.1} parent=39 // pred_check
          %p306 = pneg %p305
        $region54: #{tpu_custom_call.1} parent=39 // pred_check_branch
          %308 = sbr.rel (%p306) target = $region56
        $region55: #{tpu_custom_call.1} parent=39 // pred_region
          %v309 = vld [vmem:[%s4] sm:$0x1]
          %v311 = vlaneseq
          %v312 = vshrl.u32 %v311, 7
          %v313 = vsub.s32 0, %v312
          %v314 = vrot.slane %v309, %v313
          %316 = vst [vmem:[%s299] sm:$0xff] %v314
          %317 = vst [vmem:[%s299 + $0x8] sm:$0xff] %v314
          %318 = vst [vmem:[%s299 + $0x10] sm:$0xff] %v314
          %319 = vst [vmem:[%s299 + $0x18] sm:$0xff] %v314
          %320 = vst [vmem:[%s299 + $0x20] sm:$0xff] %v314
          %321 = vst [vmem:[%s299 + $0x28] sm:$0xff] %v314
          %322 = vst [vmem:[%s299 + $0x30] sm:$0xff] %v314
          %323 = vst [vmem:[%s299 + $0x38] sm:$0xff] %v314
          %324 = vst [vmem:[%s299 + $0x40] sm:$0xff] %v314
          %325 = vst [vmem:[%s299 + $0x48] sm:$0xff] %v314
          %326 = vst [vmem:[%s299 + $0x50] sm:$0xff] %v314
          %327 = vst [vmem:[%s299 + $0x58] sm:$0xff] %v314
          %328 = vst [vmem:[%s299 + $0x60] sm:$0xff] %v314
          %329 = vst [vmem:[%s299 + $0x68] sm:$0xff] %v314
          %330 = vst [vmem:[%s299 + $0x70] sm:$0xff] %v314
          %331 = vst [vmem:[%s299 + $0x78] sm:$0xff] %v314
        $region56: #{tpu_custom_call.1} parent=39 // pred_fallthru
          _
        %v332 = vld [vmem:[%s265] sm:$0xf]
        %v333 = vld [vmem:[%s265 + $0x4] sm:$0xf]
        %v334 = vld [vmem:[%s265 + $0x8] sm:$0xf]
        %v335 = vld [vmem:[%s265 + $0xc] sm:$0xf]
        %v336 = vld [vmem:[%s265 + $0x10] sm:$0xf]
        %v337 = vld [vmem:[%s265 + $0x14] sm:$0xf]
        %v338 = vld [vmem:[%s265 + $0x18] sm:$0xf]
        %v339 = vld [vmem:[%s265 + $0x1c] sm:$0xf]
        %v340 = vld [vmem:[%s265 + $0x20] sm:$0xf]
        %v341 = vld [vmem:[%s265 + $0x24] sm:$0xf]
        %v342 = vld [vmem:[%s265 + $0x28] sm:$0xf]
        %v343 = vld [vmem:[%s265 + $0x2c] sm:$0xf]
        %v344 = vld [vmem:[%s265 + $0x30] sm:$0xf]
        %v345 = vld [vmem:[%s265 + $0x34] sm:$0xf]
        %v346 = vld [vmem:[%s265 + $0x38] sm:$0xf]
        %v347 = vld [vmem:[%s265 + $0x3c] sm:$0xf]
        %v348 = vld [vmem:[#allocation5] sm:$0xff]
        %v349 = vld [vmem:[#allocation5 + $0x8] sm:$0xff]
        %v350 = vld [vmem:[#allocation5 + $0x10] sm:$0xff]
        %v351 = vld [vmem:[#allocation5 + $0x18] sm:$0xff]
        %v352 = vld [vmem:[#allocation5 + $0x20] sm:$0xff]
        %v353 = vld [vmem:[#allocation5 + $0x28] sm:$0xff]
        %v354 = vld [vmem:[#allocation5 + $0x30] sm:$0xff]
        %v355 = vld [vmem:[#allocation5 + $0x38] sm:$0xff]
        %v356 = vld [vmem:[#allocation5 + $0x40] sm:$0xff]
        %v357 = vld [vmem:[#allocation5 + $0x48] sm:$0xff]
        %v358 = vld [vmem:[#allocation5 + $0x50] sm:$0xff]
        %v359 = vld [vmem:[#allocation5 + $0x58] sm:$0xff]
        %v360 = vld [vmem:[#allocation5 + $0x60] sm:$0xff]
        %v361 = vld [vmem:[#allocation5 + $0x68] sm:$0xff]
        %v362 = vld [vmem:[#allocation5 + $0x70] sm:$0xff]
        %v363 = vld [vmem:[#allocation5 + $0x78] sm:$0xff]
        %s364 = smul.u32 %s28, 2
        %s365 = scalar_lea.vmem %s2, %s364
        %v366 = vld [vmem:[%s365] sm:$0x3]
        %v368 = vlaneseq
        %v369 = vshrl.u32 %v368, 7
        %v370 = vsub.s32 0, %v369
        %v371 = vrot.slane %v366, %v370
        %v372 = vlaneseq
        %v373 = vshrl.u32 %v372, 7
        %v374 = vsub.s32 1, %v373
        %v375 = vrot.slane %v366, %v374
        %v394 = vunpack.c.l.b16 %v332
        %v395 = vunpack.c.l.b16 %v333
        %v396 = vunpack.c.l.b16 %v334
        %v397 = vunpack.c.l.b16 %v335
        %v398 = vunpack.c.l.b16 %v336
        %v399 = vunpack.c.l.b16 %v337
        %v400 = vunpack.c.l.b16 %v338
        %v401 = vunpack.c.l.b16 %v339
        %v402 = vunpack.c.l.b16 %v340
        %v403 = vunpack.c.l.b16 %v341
        %v404 = vunpack.c.l.b16 %v342
        %v405 = vunpack.c.l.b16 %v343
        %v406 = vunpack.c.l.b16 %v344
        %v407 = vunpack.c.l.b16 %v345
        %v408 = vunpack.c.l.b16 %v346
        %v409 = vunpack.c.l.b16 %v347
        %v410 = vpack.c.b16 %v395, %v394
        %v411 = vpack.c.b16 %v397, %v396
        %v412 = vpack.c.b16 %v399, %v398
        %v413 = vpack.c.b16 %v401, %v400
        %v414 = vpack.c.b16 %v403, %v402
        %v415 = vpack.c.b16 %v405, %v404
        %v416 = vpack.c.b16 %v407, %v406
        %v417 = vpack.c.b16 %v409, %v408
        %v442 = vunpack.c.l.b16 %v348
        %v443 = vunpack.c.h.b16 %v348
        %v444 = vunpack.c.l.b16 %v349
        %v445 = vunpack.c.h.b16 %v349
        %v446 = vunpack.c.l.b16 %v350
        %v447 = vunpack.c.h.b16 %v350
        %v448 = vunpack.c.l.b16 %v351
        %v449 = vunpack.c.h.b16 %v351
        %v450 = vunpack.c.l.b16 %v352
        %v451 = vunpack.c.h.b16 %v352
        %v452 = vunpack.c.l.b16 %v353
        %v453 = vunpack.c.h.b16 %v353
        %v454 = vunpack.c.l.b16 %v354
        %v455 = vunpack.c.h.b16 %v354
        %v456 = vunpack.c.l.b16 %v355
        %v457 = vunpack.c.h.b16 %v355
        %v458 = vunpack.c.l.b16 %v356
        %v459 = vunpack.c.h.b16 %v356
        %v460 = vunpack.c.l.b16 %v357
        %v461 = vunpack.c.h.b16 %v357
        %v462 = vunpack.c.l.b16 %v358
        %v463 = vunpack.c.h.b16 %v358
        %v464 = vunpack.c.l.b16 %v359
        %v465 = vunpack.c.h.b16 %v359
        %v466 = vunpack.c.l.b16 %v360
        %v467 = vunpack.c.h.b16 %v360
        %v468 = vunpack.c.l.b16 %v361
        %v469 = vunpack.c.h.b16 %v361
        %v470 = vunpack.c.l.b16 %v362
        %v471 = vunpack.c.h.b16 %v362
        %v472 = vunpack.c.l.b16 %v363
        %v473 = vunpack.c.h.b16 %v363
        %v474 = vpack.c.b16 %v444, %v442
        %v475 = vpack.c.b16 %v445, %v443
        %v476 = vpack.c.b16 %v448, %v446
        %v477 = vpack.c.b16 %v449, %v447
        %v478 = vpack.c.b16 %v452, %v450
        %v479 = vpack.c.b16 %v453, %v451
        %v480 = vpack.c.b16 %v456, %v454
        %v481 = vpack.c.b16 %v457, %v455
        %v482 = vpack.c.b16 %v460, %v458
        %v483 = vpack.c.b16 %v461, %v459
        %v484 = vpack.c.b16 %v464, %v462
        %v485 = vpack.c.b16 %v465, %v463
        %v486 = vpack.c.b16 %v468, %v466
        %v487 = vpack.c.b16 %v469, %v467
        %v488 = vpack.c.b16 %v472, %v470
        %v489 = vpack.c.b16 %v473, %v471
        %506 = vmatprep.subr.bf16.mxu0 %v475
        %507 = vmatpush1.bf16.msra.mxu0 %v474
        %508 = vmatprep.subr.bf16.mxu0 %v477
        %509 = vmatpush1.bf16.msra.mxu0 %v476
        %510 = vmatprep.subr.bf16.mxu0 %v479
        %511 = vmatpush1.bf16.msra.mxu0 %v478
        %512 = vmatprep.subr.bf16.mxu0 %v481
        %513 = vmatpush1.bf16.msra.mxu0 %v480
        %514 = vmatprep.subr.bf16.mxu0 %v483
        %515 = vmatpush1.bf16.msra.mxu0 %v482
        %516 = vmatprep.subr.bf16.mxu0 %v485
        %517 = vmatpush1.bf16.msra.mxu0 %v484
        %518 = vmatprep.subr.bf16.mxu0 %v487
        %519 = vmatpush1.bf16.msra.mxu0 %v486
        %520 = vmatprep.subr.bf16.mxu0 %v489
        %521 = vmatpush1.bf16.msra.mxu0 %v488
        %522 = vmatprep.subr.bf16.mxu0 0
        %523 = vmatpush1.bf16.msra.mxu0 0
        %524 = vmatprep.subr.bf16.mxu0 0
        %525 = vmatpush1.bf16.msra.mxu0 0
        %526 = vmatprep.subr.bf16.mxu0 0
        %527 = vmatpush1.bf16.msra.mxu0 0
        %528 = vmatprep.subr.bf16.mxu0 0
        %529 = vmatpush1.bf16.msra.mxu0 0
        %530 = vmatprep.subr.bf16.mxu0 0
        %531 = vmatpush1.bf16.msra.mxu0 0
        %532 = vmatprep.subr.bf16.mxu0 0
        %533 = vmatpush1.bf16.msra.mxu0 0
        %534 = vmatprep.subr.bf16.mxu0 0
        %535 = vmatpush1.bf16.msra.mxu0 0
        %536 = vmatprep.subr.bf16.mxu0 0
        %537 = vmatpush1.bf16.msra.mxu0 0
        %538 = vmatprep.mubr.bf16.mxu0 0
        %539 = vmatmul.mubr.bf16.gmra.mrb[0].mxu0 %v410
        %v540 = vpop.f32.mrb[0].mxu0
        %v541 = vadd.f32 %v371, %v540
        %v542 = vpop.f32.mrb[0].mxu0
        %v543 = vadd.f32 %v375, %v542
        %v544 = vpop.f32.mrb[0].mxu0
        %v545 = vadd.f32 %v371, %v544
        %v546 = vpop.f32.mrb[0].mxu0
        %v547 = vadd.f32 %v375, %v546
        %548 = vmatprep.mubr.bf16.mxu0 0
        %549 = vmatmul.mubr.bf16.gmra.mrb[0].mxu0 %v411
        %v550 = vpop.f32.mrb[0].mxu0
        %v551 = vadd.f32 %v371, %v550
        %v552 = vpop.f32.mrb[0].mxu0
        %v553 = vadd.f32 %v375, %v552
        %v554 = vpop.f32.mrb[0].mxu0
        %v555 = vadd.f32 %v371, %v554
        %v556 = vpop.f32.mrb[0].mxu0
        %v557 = vadd.f32 %v375, %v556
        %558 = vmatprep.mubr.bf16.mxu0 0
        %559 = vmatmul.mubr.bf16.gmra.mrb[0].mxu0 %v412
        %v560 = vpop.f32.mrb[0].mxu0
        %v561 = vadd.f32 %v371, %v560
        %v562 = vpop.f32.mrb[0].mxu0
        %v563 = vadd.f32 %v375, %v562
        %v564 = vpop.f32.mrb[0].mxu0
        %v565 = vadd.f32 %v371, %v564
        %v566 = vpop.f32.mrb[0].mxu0
        %v567 = vadd.f32 %v375, %v566
        %568 = vmatprep.mubr.bf16.mxu0 0
        %569 = vmatmul.mubr.bf16.gmra.mrb[0].mxu0 %v413
        %v570 = vpop.f32.mrb[0].mxu0
        %v571 = vadd.f32 %v371, %v570
        %v572 = vpop.f32.mrb[0].mxu0
        %v573 = vadd.f32 %v375, %v572
        %v574 = vpop.f32.mrb[0].mxu0
        %v575 = vadd.f32 %v371, %v574
        %v576 = vpop.f32.mrb[0].mxu0
        %v577 = vadd.f32 %v375, %v576
        %578 = vmatprep.mubr.bf16.mxu0 0
        %579 = vmatmul.mubr.bf16.gmra.mrb[0].mxu0 %v414
        %v580 = vpop.f32.mrb[0].mxu0
        %v581 = vadd.f32 %v371, %v580
        %v582 = vpop.f32.mrb[0].mxu0
        %v583 = vadd.f32 %v375, %v582
        %v584 = vpop.f32.mrb[0].mxu0
        %v585 = vadd.f32 %v371, %v584
        %v586 = vpop.f32.mrb[0].mxu0
        %v587 = vadd.f32 %v375, %v586
        %588 = vmatprep.mubr.bf16.mxu0 0
        %589 = vmatmul.mubr.bf16.gmra.mrb[0].mxu0 %v415
        %v590 = vpop.f32.mrb[0].mxu0
        %v591 = vadd.f32 %v371, %v590
        %v592 = vpop.f32.mrb[0].mxu0
        %v593 = vadd.f32 %v375, %v592
        %v594 = vpop.f32.mrb[0].mxu0
        %v595 = vadd.f32 %v371, %v594
        %v596 = vpop.f32.mrb[0].mxu0
        %v597 = vadd.f32 %v375, %v596
        %598 = vmatprep.mubr.bf16.mxu0 0
        %599 = vmatmul.mubr.bf16.gmra.mrb[0].mxu0 %v416
        %v600 = vpop.f32.mrb[0].mxu0
        %v601 = vadd.f32 %v371, %v600
        %v602 = vpop.f32.mrb[0].mxu0
        %v603 = vadd.f32 %v375, %v602
        %v604 = vpop.f32.mrb[0].mxu0
        %v605 = vadd.f32 %v371, %v604
        %v606 = vpop.f32.mrb[0].mxu0
        %v607 = vadd.f32 %v375, %v606
        %608 = vmatprep.mubr.bf16.mxu0 0
        %609 = vmatmul.mubr.bf16.gmra.mrb[0].mxu0 %v417
        %v610 = vpop.f32.mrb[0].mxu0
        %v611 = vadd.f32 %v371, %v610
        %v612 = vpop.f32.mrb[0].mxu0
        %v613 = vadd.f32 %v375, %v612
        %v614 = vpop.f32.mrb[0].mxu0
        %v615 = vadd.f32 %v371, %v614
        %v616 = vpop.f32.mrb[0].mxu0
        %v617 = vadd.f32 %v375, %v616
        %618 = vdwg.mxu0
        %v619 = vmax.f32 %v541, 0.0
        %v620 = vmax.f32 %v543, 0.0
        %v621 = vmax.f32 %v545, 0.0
        %v622 = vmax.f32 %v547, 0.0
        %v623 = vmax.f32 %v551, 0.0
        %v624 = vmax.f32 %v553, 0.0
        %v625 = vmax.f32 %v555, 0.0
        %v626 = vmax.f32 %v557, 0.0
        %v627 = vmax.f32 %v561, 0.0
        %v628 = vmax.f32 %v563, 0.0
        %v629 = vmax.f32 %v565, 0.0
        %v630 = vmax.f32 %v567, 0.0
        %v631 = vmax.f32 %v571, 0.0
        %v632 = vmax.f32 %v573, 0.0
        %v633 = vmax.f32 %v575, 0.0
        %v634 = vmax.f32 %v577, 0.0
        %v635 = vmax.f32 %v581, 0.0
        %v636 = vmax.f32 %v583, 0.0
        %v637 = vmax.f32 %v585, 0.0
        %v638 = vmax.f32 %v587, 0.0
        %v639 = vmax.f32 %v591, 0.0
        %v640 = vmax.f32 %v593, 0.0
        %v641 = vmax.f32 %v595, 0.0
        %v642 = vmax.f32 %v597, 0.0
        %v643 = vmax.f32 %v601, 0.0
        %v644 = vmax.f32 %v603, 0.0
        %v645 = vmax.f32 %v605, 0.0
        %v646 = vmax.f32 %v607, 0.0
        %v647 = vmax.f32 %v611, 0.0
        %v648 = vmax.f32 %v613, 0.0
        %v649 = vmax.f32 %v615, 0.0
        %v650 = vmax.f32 %v617, 0.0
        %v651 = vld [vmem:[%s299] sm:$0xff]
        %v652 = vld [vmem:[%s299 + $0x8] sm:$0xff]
        %v653 = vld [vmem:[%s299 + $0x10] sm:$0xff]
        %v654 = vld [vmem:[%s299 + $0x18] sm:$0xff]
        %v655 = vld [vmem:[%s299 + $0x20] sm:$0xff]
        %v656 = vld [vmem:[%s299 + $0x28] sm:$0xff]
        %v657 = vld [vmem:[%s299 + $0x30] sm:$0xff]
        %v658 = vld [vmem:[%s299 + $0x38] sm:$0xff]
        %v659 = vld [vmem:[%s299 + $0x40] sm:$0xff]
        %v660 = vld [vmem:[%s299 + $0x48] sm:$0xff]
        %v661 = vld [vmem:[%s299 + $0x50] sm:$0xff]
        %v662 = vld [vmem:[%s299 + $0x58] sm:$0xff]
        %v663 = vld [vmem:[%s299 + $0x60] sm:$0xff]
        %v664 = vld [vmem:[%s299 + $0x68] sm:$0xff]
        %v665 = vld [vmem:[%s299 + $0x70] sm:$0xff]
        %v666 = vld [vmem:[%s299 + $0x78] sm:$0xff]
        %v667 = vpack.c.bf16 %v621, %v619
        %v668 = vpack.c.bf16 %v622, %v620
        %v669 = vpack.c.bf16 %v625, %v623
        %v670 = vpack.c.bf16 %v626, %v624
        %v671 = vpack.c.bf16 %v629, %v627
        %v672 = vpack.c.bf16 %v630, %v628
        %v673 = vpack.c.bf16 %v633, %v631
        %v674 = vpack.c.bf16 %v634, %v632
        %v675 = vpack.c.bf16 %v637, %v635
        %v676 = vpack.c.bf16 %v638, %v636
        %v677 = vpack.c.bf16 %v641, %v639
        %v678 = vpack.c.bf16 %v642, %v640
        %v679 = vpack.c.bf16 %v645, %v643
        %v680 = vpack.c.bf16 %v646, %v644
        %v681 = vpack.c.bf16 %v649, %v647
        %v682 = vpack.c.bf16 %v650, %v648
        %v683 = vld [vmem:[#allocation7] sm:$0xf]
        %v684 = vld [vmem:[#allocation7 + $0x4] sm:$0xf]
        %v685 = vld [vmem:[#allocation7 + $0x8] sm:$0xf]
        %v686 = vld [vmem:[#allocation7 + $0xc] sm:$0xf]
        %v687 = vld [vmem:[#allocation7 + $0x10] sm:$0xf]
        %v688 = vld [vmem:[#allocation7 + $0x14] sm:$0xf]
        %v689 = vld [vmem:[#allocation7 + $0x18] sm:$0xf]
        %v690 = vld [vmem:[#allocation7 + $0x1c] sm:$0xf]
        %v691 = vld [vmem:[#allocation7 + $0x20] sm:$0xf]
        %v692 = vld [vmem:[#allocation7 + $0x24] sm:$0xf]
        %v693 = vld [vmem:[#allocation7 + $0x28] sm:$0xf]
        %v694 = vld [vmem:[#allocation7 + $0x2c] sm:$0xf]
        %v695 = vld [vmem:[#allocation7 + $0x30] sm:$0xf]
        %v696 = vld [vmem:[#allocation7 + $0x34] sm:$0xf]
        %v697 = vld [vmem:[#allocation7 + $0x38] sm:$0xf]
        %v698 = vld [vmem:[#allocation7 + $0x3c] sm:$0xf]
        %v699 = vld [vmem:[#allocation7 + $0x40] sm:$0xf]
        %v700 = vld [vmem:[#allocation7 + $0x44] sm:$0xf]
        %v701 = vld [vmem:[#allocation7 + $0x48] sm:$0xf]
        %v702 = vld [vmem:[#allocation7 + $0x4c] sm:$0xf]
        %v703 = vld [vmem:[#allocation7 + $0x50] sm:$0xf]
        %v704 = vld [vmem:[#allocation7 + $0x54] sm:$0xf]
        %v705 = vld [vmem:[#allocation7 + $0x58] sm:$0xf]
        %v706 = vld [vmem:[#allocation7 + $0x5c] sm:$0xf]
        %v707 = vld [vmem:[#allocation7 + $0x60] sm:$0xf]
        %v708 = vld [vmem:[#allocation7 + $0x64] sm:$0xf]
        %v709 = vld [vmem:[#allocation7 + $0x68] sm:$0xf]
        %v710 = vld [vmem:[#allocation7 + $0x6c] sm:$0xf]
        %v711 = vld [vmem:[#allocation7 + $0x70] sm:$0xf]
        %v712 = vld [vmem:[#allocation7 + $0x74] sm:$0xf]
        %v713 = vld [vmem:[#allocation7 + $0x78] sm:$0xf]
        %v714 = vld [vmem:[#allocation7 + $0x7c] sm:$0xf]
        %v747 = vunpack.c.l.b16 %v683
        %v748 = vunpack.c.l.b16 %v684
        %v749 = vunpack.c.l.b16 %v685
        %v750 = vunpack.c.l.b16 %v686
        %v751 = vunpack.c.l.b16 %v687
        %v752 = vunpack.c.l.b16 %v688
        %v753 = vunpack.c.l.b16 %v689
        %v754 = vunpack.c.l.b16 %v690
        %v755 = vunpack.c.l.b16 %v691
        %v756 = vunpack.c.l.b16 %v692
        %v757 = vunpack.c.l.b16 %v693
        %v758 = vunpack.c.l.b16 %v694
        %v759 = vunpack.c.l.b16 %v695
        %v760 = vunpack.c.l.b16 %v696
        %v761 = vunpack.c.l.b16 %v697
        %v762 = vunpack.c.l.b16 %v698
        %v763 = vunpack.c.l.b16 %v699
        %v764 = vunpack.c.l.b16 %v700
        %v765 = vunpack.c.l.b16 %v701
        %v766 = vunpack.c.l.b16 %v702
        %v767 = vunpack.c.l.b16 %v703
        %v768 = vunpack.c.l.b16 %v704
        %v769 = vunpack.c.l.b16 %v705
        %v770 = vunpack.c.l.b16 %v706
        %v771 = vunpack.c.l.b16 %v707
        %v772 = vunpack.c.l.b16 %v708
        %v773 = vunpack.c.l.b16 %v709
        %v774 = vunpack.c.l.b16 %v710
        %v775 = vunpack.c.l.b16 %v711
        %v776 = vunpack.c.l.b16 %v712
        %v777 = vunpack.c.l.b16 %v713
        %v778 = vunpack.c.l.b16 %v714
        %v779 = vpack.c.b16 %v748, %v747
        %v780 = vpack.c.b16 %v750, %v749
        %v781 = vpack.c.b16 %v752, %v751
        %v782 = vpack.c.b16 %v754, %v753
        %v783 = vpack.c.b16 %v756, %v755
        %v784 = vpack.c.b16 %v758, %v757
        %v785 = vpack.c.b16 %v760, %v759
        %v786 = vpack.c.b16 %v762, %v761
        %v787 = vpack.c.b16 %v764, %v763
        %v788 = vpack.c.b16 %v766, %v765
        %v789 = vpack.c.b16 %v768, %v767
        %v790 = vpack.c.b16 %v770, %v769
        %v791 = vpack.c.b16 %v772, %v771
        %v792 = vpack.c.b16 %v774, %v773
        %v793 = vpack.c.b16 %v776, %v775
        %v794 = vpack.c.b16 %v778, %v777
        %811 = vmatprep.subr.bf16.mxu0 0
        %812 = vmatpush1.bf16.msra.mxu0 %v779
        %813 = vmatprep.subr.bf16.mxu0 0
        %814 = vmatpush1.bf16.msra.mxu0 %v780
        %815 = vmatprep.subr.bf16.mxu0 0
        %816 = vmatpush1.bf16.msra.mxu0 %v781
        %817 = vmatprep.subr.bf16.mxu0 0
        %818 = vmatpush1.bf16.msra.mxu0 %v782
        %819 = vmatprep.subr.bf16.mxu0 0
        %820 = vmatpush1.bf16.msra.mxu0 %v783
        %821 = vmatprep.subr.bf16.mxu0 0
        %822 = vmatpush1.bf16.msra.mxu0 %v784
        %823 = vmatprep.subr.bf16.mxu0 0
        %824 = vmatpush1.bf16.msra.mxu0 %v785
        %825 = vmatprep.subr.bf16.mxu0 0
        %826 = vmatpush1.bf16.msra.mxu0 %v786
        %827 = vmatprep.subr.bf16.mxu0 0
        %828 = vmatpush1.bf16.msra.mxu0 %v787
        %829 = vmatprep.subr.bf16.mxu0 0
        %830 = vmatpush1.bf16.msra.mxu0 %v788
        %831 = vmatprep.subr.bf16.mxu0 0
        %832 = vmatpush1.bf16.msra.mxu0 %v789
        %833 = vmatprep.subr.bf16.mxu0 0
        %834 = vmatpush1.bf16.msra.mxu0 %v790
        %835 = vmatprep.subr.bf16.mxu0 0
        %836 = vmatpush1.bf16.msra.mxu0 %v791
        %837 = vmatprep.subr.bf16.mxu0 0
        %838 = vmatpush1.bf16.msra.mxu0 %v792
        %839 = vmatprep.subr.bf16.mxu0 0
        %840 = vmatpush1.bf16.msra.mxu0 %v793
        %841 = vmatprep.subr.bf16.mxu0 0
        %842 = vmatpush1.bf16.msra.mxu0 %v794
        %843 = vmatprep.mubr.bf16.mxu0 %v668
        %844 = vmatmul.mubr.bf16.gmra.mrb[0].mxu0 %v667
        %v845 = vpop.f32.mrb[0].mxu0
        %v846 = vadd.f32 0.0, %v845
        %v847 = vpop.f32.mrb[0].mxu0
        %v848 = vpop.f32.mrb[0].mxu0
        %v849 = vadd.f32 0.0, %v848
        %v850 = vpop.f32.mrb[0].mxu0
        %851 = vmatprep.mubr.bf16.mxu0 %v670
        %852 = vmatmul.mubr.bf16.gmra.mrb[0].mxu0 %v669
        %v853 = vpop.f32.mrb[0].mxu0
        %v854 = vadd.f32 0.0, %v853
        %v855 = vpop.f32.mrb[0].mxu0
        %v856 = vpop.f32.mrb[0].mxu0
        %v857 = vadd.f32 0.0, %v856
        %v858 = vpop.f32.mrb[0].mxu0
        %859 = vmatprep.mubr.bf16.mxu0 %v672
        %860 = vmatmul.mubr.bf16.gmra.mrb[0].mxu0 %v671
        %v861 = vpop.f32.mrb[0].mxu0
        %v862 = vadd.f32 0.0, %v861
        %v863 = vpop.f32.mrb[0].mxu0
        %v864 = vpop.f32.mrb[0].mxu0
        %v865 = vadd.f32 0.0, %v864
        %v866 = vpop.f32.mrb[0].mxu0
        %867 = vmatprep.mubr.bf16.mxu0 %v674
        %868 = vmatmul.mubr.bf16.gmra.mrb[0].mxu0 %v673
        %v869 = vpop.f32.mrb[0].mxu0
        %v870 = vadd.f32 0.0, %v869
        %v871 = vpop.f32.mrb[0].mxu0
        %v872 = vpop.f32.mrb[0].mxu0
        %v873 = vadd.f32 0.0, %v872
        %v874 = vpop.f32.mrb[0].mxu0
        %875 = vmatprep.mubr.bf16.mxu0 %v676
        %876 = vmatmul.mubr.bf16.gmra.mrb[0].mxu0 %v675
        %v877 = vpop.f32.mrb[0].mxu0
        %v878 = vadd.f32 0.0, %v877
        %v879 = vpop.f32.mrb[0].mxu0
        %v880 = vpop.f32.mrb[0].mxu0
        %v881 = vadd.f32 0.0, %v880
        %v882 = vpop.f32.mrb[0].mxu0
        %883 = vmatprep.mubr.bf16.mxu0 %v678
        %884 = vmatmul.mubr.bf16.gmra.mrb[0].mxu0 %v677
        %v885 = vpop.f32.mrb[0].mxu0
        %v886 = vadd.f32 0.0, %v885
        %v887 = vpop.f32.mrb[0].mxu0
        %v888 = vpop.f32.mrb[0].mxu0
        %v889 = vadd.f32 0.0, %v888
        %v890 = vpop.f32.mrb[0].mxu0
        %891 = vmatprep.mubr.bf16.mxu0 %v680
        %892 = vmatmul.mubr.bf16.gmra.mrb[0].mxu0 %v679
        %v893 = vpop.f32.mrb[0].mxu0
        %v894 = vadd.f32 0.0, %v893
        %v895 = vpop.f32.mrb[0].mxu0
        %v896 = vpop.f32.mrb[0].mxu0
        %v897 = vadd.f32 0.0, %v896
        %v898 = vpop.f32.mrb[0].mxu0
        %899 = vmatprep.mubr.bf16.mxu0 %v682
        %900 = vmatmul.mubr.bf16.gmra.mrb[0].mxu0 %v681
        %v901 = vpop.f32.mrb[0].mxu0
        %v902 = vadd.f32 0.0, %v901
        %v903 = vpop.f32.mrb[0].mxu0
        %v904 = vpop.f32.mrb[0].mxu0
        %v905 = vadd.f32 0.0, %v904
        %v906 = vpop.f32.mrb[0].mxu0
        %907 = vdwg.mxu0
        %v908 = vadd.f32 %v651, %v846
        %v909 = vadd.f32 %v652, %v849
        %v910 = vadd.f32 %v653, %v854
        %v911 = vadd.f32 %v654, %v857
        %v912 = vadd.f32 %v655, %v862
        %v913 = vadd.f32 %v656, %v865
        %v914 = vadd.f32 %v657, %v870
        %v915 = vadd.f32 %v658, %v873
        %v916 = vadd.f32 %v659, %v878
        %v917 = vadd.f32 %v660, %v881
        %v918 = vadd.f32 %v661, %v886
        %v919 = vadd.f32 %v662, %v889
        %v920 = vadd.f32 %v663, %v894
        %v921 = vadd.f32 %v664, %v897
        %v922 = vadd.f32 %v665, %v902
        %v923 = vadd.f32 %v666, %v905
        %924 = vst [vmem:[%s299] sm:$0xff] %v908
        %925 = vst [vmem:[%s299 + $0x8] sm:$0xff] %v909
        %926 = vst [vmem:[%s299 + $0x10] sm:$0xff] %v910
        %927 = vst [vmem:[%s299 + $0x18] sm:$0xff] %v911
        %928 = vst [vmem:[%s299 + $0x20] sm:$0xff] %v912
        %929 = vst [vmem:[%s299 + $0x28] sm:$0xff] %v913
        %930 = vst [vmem:[%s299 + $0x30] sm:$0xff] %v914
        %931 = vst [vmem:[%s299 + $0x38] sm:$0xff] %v915
        %932 = vst [vmem:[%s299 + $0x40] sm:$0xff] %v916
        %933 = vst [vmem:[%s299 + $0x48] sm:$0xff] %v917
        %934 = vst [vmem:[%s299 + $0x50] sm:$0xff] %v918
        %935 = vst [vmem:[%s299 + $0x58] sm:$0xff] %v919
        %936 = vst [vmem:[%s299 + $0x60] sm:$0xff] %v920
        %937 = vst [vmem:[%s299 + $0x68] sm:$0xff] %v921
        %938 = vst [vmem:[%s299 + $0x70] sm:$0xff] %v922
        %939 = vst [vmem:[%s299 + $0x78] sm:$0xff] %v923
        %s940 = sand.u32 %s163, 1
        %s941 = scalar_lea.sflag [#allocation4], %s940
        %s942 = sand.u32 %s163, 1
        %s943 = smul.addr %s942, 128
        %s944 = scalar_lea.vmem [#allocation8], %s943
        // Predicated region
        $region57: #{tpu_custom_call.1} parent=39 // pred_check
          %p945 = pneg %p173
        $region58: #{tpu_custom_call.1} parent=39 // pred_check_branch
          %947 = sbr.rel (%p945) target = $region60
        $region59: #{tpu_custom_call.1} parent=39 // pred_region
          %s948 = smul.u32 16, %s27
          %s950 = ssub.s32 2048, 2048
          %951 = vsyncadd %s941, %s950
          %s952 = smul.addr %s948, 128
          %s953 = scalar_lea.hbm %s5, %s952
          %s954 = sshll.u32 %s944, 4
          %s955 = int_to_ptr.vmem [resolvable:$true] %s954
          %960 = dma.vmem_to_hbm [thread:$0]  %s955, 2048, %s953, %s941, 128, 128, 8
        $region60: #{tpu_custom_call.1} parent=39 // pred_fallthru
          _
      $region40: #{tpu_custom_call.1} parent=5 // pred_fallthru
        _
      %p961 = scmp.le.s32.totalorder 2, %s18
      // Predicated region
      $region61: #{tpu_custom_call.1} parent=5 // pred_check
        %p962 = pneg %p961
      $region62: #{tpu_custom_call.1} parent=5 // pred_check_branch
        %964 = sbr.rel (%p962) target = $region64
      $region63: #{tpu_custom_call.1} parent=5 // pred_region
        %s965 = ssub.s32 %s18, 2
        // Predicated region
        $region65: #{tpu_custom_call.1} parent=63 // pred_check
          %p966 = pneg %p179
        $region66: #{tpu_custom_call.1} parent=63 // pred_check_branch
          %968 = sbr.rel (%p966) target = $region68
        $region67: #{tpu_custom_call.1} parent=63 // pred_region
          %s969 = sand.u32 %s164, 1
          %s970 = scalar_lea.sflag [#allocation4], %s969
          %s971 = sand.u32 %s164, 1
          %s972 = smul.addr %s971, 128
          %s973 = scalar_lea.vmem [#allocation8], %s972
          %974 = dma.done %s970, 2048
        $region68: #{tpu_custom_call.1} parent=63 // pred_fallthru
          _
      $region64: #{tpu_custom_call.1} parent=5 // pred_fallthru
        _
    $region6: #{tpu_custom_call.1} parent=1 // loop_footer
      %s22 = sadd.s32 1, %s18
    $region7: #{tpu_custom_call.1} parent=1 // loop_footer_branch
      %17 = sbr.rel target = $region3
    $region8: #{tpu_custom_call.1} parent=1 // loop_exit
      _
    %975 = vsyncpa [#allocation3], 1
    %s976 = scalar_lea.sflag [#allocation3], 1
    %977 = vsyncpa %s976, 1
    %978 = vsyncpa [#allocation6], 1
    %979 = vsyncpa [#allocation4], 1
    %s980 = scalar_lea.sflag [#allocation4], 1
    %981 = vsyncpa %s980, 1

</llo_original>
